<compile_context>
chip_gen: v7x
topology: tpu7x:2x2x1
jax: 0.10.0
libtpu: 0.0.40
codegen_flags: <defaults>
</compile_context>

<pallas_src>
import functools

import jax
import jax.numpy as jnp
from jax.experimental import pallas as pl
from jax.experimental.pallas import tpu as pltpu


# --------------------------------------------------------------------------- #
# Per-generation budgets
# --------------------------------------------------------------------------- #
def _tpu_budget():
    """Returns (block_target_bytes, fused_x_limit_bytes, vmem_limit_bytes, multi_tc)."""
    kind = ""
    try:
        kind = jax.devices()[0].device_kind.lower()
    except Exception:
        pass
    is_v7 = "v7" in kind

    vmem_cap = None
    try:
        vmem_cap = int(pltpu.get_tpu_info().vmem_capacity_bytes)
    except Exception:
        vmem_cap = None
    if vmem_cap is None:
        # Conservative fallback: assume 64 MiB unless we positively detect v4/v5/v6.
        vmem_cap = (128 << 20) if any(v in kind for v in ("v4", "v5", "v6")) else (64 << 20)

    small_vmem = is_v7 or vmem_cap < (96 << 20)
    block_target = (4 << 20) if small_vmem else (8 << 20)        # per-block bytes
    fused_x_limit = (10 << 20) if small_vmem else (20 << 20)     # |x| cutoff (4x w/ dbl-buf)
    vmem_limit = max(32 << 20, min(vmem_cap * 3 // 4, 100 << 20))
    multi_tc = is_v7 or ("v4" in kind) or ("v5p" in kind)
    return block_target, fused_x_limit, vmem_limit, multi_tc


def _tile_2d(C, HW, itemsize, block_target, split_c=False):
    """Pick (channel_tile, spatial_tile): multiples of (8, 128) dividing (C, HW),
    or the full dim when not divisible; block ~= block_target bytes."""
    if C % 8 == 0 and split_c and C >= 16:
        ct = max(8, (C // 2) // 8 * 8)
        while C % ct:
            ct -= 8
    else:
        ct = C
    if HW % 128 == 0:
        max_st = max(128, (block_target // max(1, ct * itemsize)) // 128 * 128)
        st = min(HW, max_st)
        while HW % st:
            st -= 128
    else:
        st = HW
    if C % 8 == 0 and ct * st * itemsize > block_target:
        max_ct = max(8, (block_target // max(1, st * itemsize)) // 8 * 8)
        nct = min(ct, max_ct)
        while C % nct:
            nct -= 8
        ct = nct
    return ct, st


# --------------------------------------------------------------------------- #
# Fused kernel: whole x resident -> reduce + MLP + sigmoid + apply in one pass
# --------------------------------------------------------------------------- #
def _fused_kernel(x_ref, w1_ref, b1_ref, w2_ref, b2_ref, o_ref, *, inv_count):
    x = x_ref[...]                                          # (B, C, HW) native dtype
    xf = x.astype(jnp.float32)

    mx = jnp.max(jnp.max(x, axis=2, keepdims=True), axis=0).astype(jnp.float32)   # (C, 1)
    mn = jnp.sum(jnp.sum(xf, axis=2, keepdims=True), axis=0) * inv_count          # (C, 1)
    vm = jnp.concatenate([mx, mn], axis=1)                                        # (C, 2)

    # Tiny MLP, both columns at once, lane-dense dots (no 3-D broadcast temps).
    h = jnp.maximum(
        jnp.dot(w1_ref[...], vm, preferred_element_type=jnp.float32) + b1_ref[...], 0.0)  # (Hd, 2)
    o = jnp.dot(w2_ref[...], h, preferred_element_type=jnp.float32) + b2_ref[...]         # (C, 2)
    att = jax.nn.sigmoid(o[:, 0:1] + o[:, 1:2])                                           # (C, 1) f32

    # Multiply in f32, cast only the product (matters for bf16 inputs).
    o_ref[...] = (xf * att[None, :, :]).astype(o_ref.dtype)


# --------------------------------------------------------------------------- #
# Phase 1: per-channel-tile max / sum over (batch, spatial) -> (C, 2) f32
# --------------------------------------------------------------------------- #
def _reduce_kernel(x_ref, red_ref, max_s, sum_s, *, acc_w, n_slices):
    b = pl.program_id(1)
    s = pl.program_id(2)

    @pl.when(jnp.logical_and(b == 0, s == 0))
    def _init():
        max_s[...] = jnp.full_like(max_s, -jnp.inf)
        sum_s[...] = jnp.zeros_like(sum_s)

    blk = x_ref[0]                                          # (ct, st), native dtype
    if acc_w > 1:
        # Wide (ct, 128) accumulators: per-step work is pure VPU max/add over
        # lane-tile-aligned slices; cross-lane reduce deferred to finalize.
        m = max_s[...]
        a = sum_s[...]
        for j in range(n_slices):
            sl = blk[:, j * acc_w:(j + 1) * acc_w].astype(jnp.float32)
            m = jnp.maximum(m, sl)
            a = a + sl
        max_s[...] = m
        sum_s[...] = a
    else:
        max_s[...] = jnp.maximum(
            max_s[...], jnp.max(blk, axis=1, keepdims=True).astype(jnp.float32))
        sum_s[...] = sum_s[...] + jnp.sum(
            blk.astype(jnp.float32), axis=1, keepdims=True)

    @pl.when(jnp.logical_and(b == pl.num_programs(1) - 1,
                             s == pl.num_programs(2) - 1))
    def _finalize():
        mx = jnp.max(max_s[...], axis=1, keepdims=True)     # (ct, 1)
        sm = jnp.sum(sum_s[...], axis=1, keepdims=True)     # (ct, 1)
        red_ref[...] = jnp.concatenate([mx, sm], axis=1)    # (ct, 2)


# --------------------------------------------------------------------------- #
# Phase 2: lane-dense broadcast multiply  out[b, c, :] = x[b, c, :] * att[c]
# --------------------------------------------------------------------------- #
def _apply_kernel(x_ref, a_ref, o_ref):
    # x_ref: (1, tc, st) native dtype; a_ref: (tc, 1) f32.
    scale = a_ref[...]                                      # keep att in f32
    o_ref[...] = (x_ref[...].astype(jnp.float32) * scale[None, :, :]).astype(o_ref.dtype)


# --------------------------------------------------------------------------- #
# Wrapper
# --------------------------------------------------------------------------- #
def semantic_attention_module(x, w1, b1, w2, b2, *, force_two_phase=False):
    """x: (B, C, H, W); w1: (Hd, C); b1: (Hd,); w2: (C, Hd); b2: (C,)."""
    B, C, H, W = x.shape
    HW = H * W
    Hd = w1.shape[0]
    itemsize = jnp.dtype(x.dtype).itemsize
    x_bytes = B * C * HW * itemsize
    inv_count = 1.0 / float(B * HW)

    block_target, fused_x_limit, vmem_limit, multi_tc = _tpu_budget()

    x3 = x.reshape(B, C, HW)                                # lane-dense spatial axis
    w1f = w1.astype(jnp.float32)
    b1f = b1.astype(jnp.float32)
    w2f = w2.astype(jnp.float32)
    b2f = b2.astype(jnp.float32)

    # ---- Fused single-pass path (x fits comfortably in VMEM) ------------------
    if not force_two_phase and x_bytes <= fused_x_limit:
        out3 = pl.pallas_call(
            functools.partial(_fused_kernel, inv_count=inv_count),
            out_shape=jax.ShapeDtypeStruct((B, C, HW), x.dtype),
            grid_spec=pltpu.PrefetchScalarGridSpec(
                num_scalar_prefetch=0,
                grid=(1,),
                in_specs=[
                    pl.BlockSpec((B, C, HW), lambda i: (0, 0, 0)),
                    pl.BlockSpec((Hd, C), lambda i: (0, 0)),
                    pl.BlockSpec((Hd, 1), lambda i: (0, 0)),
                    pl.BlockSpec((C, Hd), lambda i: (0, 0)),
                    pl.BlockSpec((C, 1), lambda i: (0, 0)),
                ],
                out_specs=pl.BlockSpec((B, C, HW), lambda i: (0, 0, 0)),
            ),
            compiler_params=pltpu.CompilerParams(
                dimension_semantics=("arbitrary",),
                vmem_limit_bytes=vmem_limit),
        )(x3, w1f, b1f.reshape(Hd, 1), w2f, b2f.reshape(C, 1))
        return out3.reshape(B, C, H, W)

    # ---- Two-phase path --------------------------------------------------------
    # Phase 1: per-channel max/sum reduction -> (C, 2) f32
    ct, st = _tile_2d(C, HW, itemsize, block_target, split_c=multi_tc)
    n_ct, ns = C // ct, HW // st
    if st % 128 == 0 and (st // 128) <= 32:
        acc_w, n_slices = 128, st // 128
    else:
        acc_w, n_slices = 1, 1

    red = pl.pallas_call(
        functools.partial(_reduce_kernel, acc_w=acc_w, n_slices=n_slices),
        out_shape=jax.ShapeDtypeStruct((C, 2), jnp.float32),
        grid_spec=pltpu.PrefetchScalarGridSpec(
            num_scalar_prefetch=0,
            grid=(n_ct, B, ns),
            in_specs=[pl.BlockSpec((1, ct, st), lambda c, b, s: (b, c, s))],
            out_specs=pl.BlockSpec((ct, 2), lambda c, b, s: (c, 0)),
            scratch_shapes=[pltpu.VMEM((ct, acc_w), jnp.float32),
                            pltpu.VMEM((ct, acc_w), jnp.float32)],
        ),
        compiler_params=pltpu.CompilerParams(
            dimension_semantics=("parallel", "arbitrary", "arbitrary"),
            vmem_limit_bytes=vmem_limit),
    )(x3)

    # Tiny MLP + sigmoid in plain JAX (f32, lane-dense) — negligible cost,
    # keeps Phase 1 shardable across TensorCores.
    max_c = red[:, 0]
    mean_c = red[:, 1] * inv_count

    def _mlp(v):                                            # v: (C,) f32
        h = jax.nn.relu(w1f @ v + b1f)                      # (Hd,)
        return w2f @ h + b2f                                # (C,)

    att_col = jax.nn.sigmoid(_mlp(max_c) + _mlp(mean_c)).reshape(C, 1)  # (C, 1) f32

    # Phase 2: lane-dense apply, all-parallel grid, no jnp.tile of att.
    tc2, st2 = _tile_2d(C, HW, itemsize, block_target, split_c=False)
    out3 = pl.pallas_call(
        _apply_kernel,
        out_shape=jax.ShapeDtypeStruct((B, C, HW), x.dtype),
        grid_spec=pltpu.PrefetchScalarGridSpec(
            num_scalar_prefetch=0,
            grid=(B, C // tc2, HW // st2),
            in_specs=[pl.BlockSpec((1, tc2, st2), lambda b, c, s: (b, c, s)),
                      pl.BlockSpec((tc2, 1), lambda b, c, s: (c, 0))],
            out_specs=pl.BlockSpec((1, tc2, st2), lambda b, c, s: (b, c, s)),
        ),
        compiler_params=pltpu.CompilerParams(
            dimension_semantics=("parallel", "parallel", "parallel"),
            vmem_limit_bytes=vmem_limit),
    )(x3, att_col)

    return out3.reshape(B, C, H, W)


# --------------------------------------------------------------------------- #
# Pure-JAX reference mirroring the PyTorch forward
# --------------------------------------------------------------------------- #
def _reference(x, w1, b1, w2, b2):
    max_c = jnp.max(x, axis=(0, 2, 3))             # (C,)
    avg_c = jnp.mean(x, axis=(0, 2, 3))            # (C,)

    def mlp(v):                                    # v: (C,)
        h = jax.nn.relu(jnp.sum(w1 * v[None, :], axis=1) + b1)   # (Hd,)
        return jnp.sum(w2 * h[None, :], axis=1) + b2             # (C,)

    att = jax.nn.sigmoid(mlp(max_c) + mlp(avg_c))  # (C,)
    return x * att.reshape(1, -1, 1, 1)


if __name__ == "__main__":
    key = jax.random.PRNGKey(0)
    kx, k1, k2, k3, k4 = jax.random.split(key, 5)

    B, C, H, W = 2, 64, 16, 16
    reduction_rate = 16
    Hd = C // reduction_rate                       # 4

    x = jax.random.normal(kx, (B, C, H, W), dtype=jnp.float32)

    # Deterministic synthetic nn.Linear parameters (PyTorch default-init style).
    bound1 = 1.0 / (C ** 0.5)
    w1 = jax.random.uniform(k1, (Hd, C), jnp.float32, -bound1, bound1)
    b1 = jax.random.uniform(k2, (Hd,), jnp.float32, -bound1, bound1)
    bound2 = 1.0 / (Hd ** 0.5)
    w2 = jax.random.uniform(k3, (C, Hd), jnp.float32, -bound2, bound2)
    b2 = jax.random.uniform(k4, (C,), jnp.float32, -bound2, bound2)

    ref = _reference(x, w1, b1, w2, b2)

    # Fused single-pass path (the one this tensor size actually takes).
    fused_fn = jax.jit(functools.partial(semantic_attention_module,
                                         force_two_phase=False))
    out_fused = jax.block_until_ready(fused_fn(x, w1, b1, w2, b2))
    assert out_fused.shape == (B, C, H, W)
    assert jnp.allclose(out_fused, ref, rtol=1e-4, atol=1e-4), "fused path mismatch"

    # Two-phase path (taken for large tensors); exercised here for correctness.
    two_fn = jax.jit(functools.partial(semantic_attention_module,
                                       force_two_phase=True))
    out_two = jax.block_until_ready(two_fn(x, w1, b1, w2, b2))
    assert jnp.allclose(out_two, ref, rtol=1e-4, atol=1e-4), "two-phase path mismatch"

    print("KERNEL_OK")
</pallas_src>

<mosaic_0001>
module attributes {stable_mosaic.version = 11 : i64} {
  func.func @_fused_kernel(%arg0: i32, %arg1: memref<2x64x256xf32, #tpu.memory_space<vmem>>, %arg2: memref<4x64xf32, #tpu.memory_space<vmem>>, %arg3: memref<4x1xf32, #tpu.memory_space<vmem>>, %arg4: memref<64x4xf32, #tpu.memory_space<vmem>>, %arg5: memref<64x1xf32, #tpu.memory_space<vmem>>, %arg6: memref<2x64x256xf32, #tpu.memory_space<vmem>>) attributes {dimension_semantics = [#tpu.dimension_semantics<arbitrary>], iteration_bounds = array<i64: 1>, scalar_prefetch = 0 : i64, scratch_operands = 0 : i64, tpu.core_type = #tpu.core_type<tc>, window_params = [{pipeline_mode = #tpu.pipeline_mode<synchronous>, transform_indices = @transform_0, window_bounds = array<i64: 2, 64, 256>}, {pipeline_mode = #tpu.pipeline_mode<synchronous>, transform_indices = @transform_1, window_bounds = array<i64: 4, 64>}, {pipeline_mode = #tpu.pipeline_mode<synchronous>, transform_indices = @transform_2, window_bounds = array<i64: 4, 1>}, {pipeline_mode = #tpu.pipeline_mode<synchronous>, transform_indices = @transform_3, window_bounds = array<i64: 64, 4>}, {pipeline_mode = #tpu.pipeline_mode<synchronous>, transform_indices = @transform_4, window_bounds = array<i64: 64, 1>}, {pipeline_mode = #tpu.pipeline_mode<synchronous>, transform_indices = @transform_5, window_bounds = array<i64: 2, 64, 256>}]} {
    %c0 = arith.constant 0 : index
    %c0_0 = arith.constant 0 : index
    %c0_1 = arith.constant 0 : index
    %0 = vector.load %arg1[%c0, %c0_0, %c0_1] : memref<2x64x256xf32, #tpu.memory_space<vmem>>, vector<2x64x256xf32>
    %cst = arith.constant dense<0xFF800000> : vector<2x64xf32>
    %1 = vector.multi_reduction <maximumf>, %0, %cst [2] : vector<2x64x256xf32> to vector<2x64xf32>
    %2 = vector.shape_cast %1 : vector<2x64xf32> to vector<2x64x1xf32>
    %cst_2 = arith.constant dense<0xFF800000> : vector<64x1xf32>
    %3 = vector.multi_reduction <maximumf>, %2, %cst_2 [0] : vector<2x64x1xf32> to vector<64x1xf32>
    %cst_3 = arith.constant dense<0.000000e+00> : vector<2x64xf32>
    %4 = vector.multi_reduction <add>, %0, %cst_3 [2] : vector<2x64x256xf32> to vector<2x64xf32>
    %5 = vector.shape_cast %4 : vector<2x64xf32> to vector<2x64x1xf32>
    %cst_4 = arith.constant dense<0.000000e+00> : vector<64x1xf32>
    %6 = vector.multi_reduction <add>, %5, %cst_4 [0] : vector<2x64x1xf32> to vector<64x1xf32>
    %cst_5 = arith.constant 0.001953125 : f32
    %7 = vector.broadcast %cst_5 : f32 to vector<64x1xf32>
    %8 = arith.mulf %6, %7 : vector<64x1xf32>
    %9 = tpu.concatenate %3, %8 in 1 : vector<64x1xf32>, vector<64x1xf32> -> vector<64x2xf32>
    %c0_6 = arith.constant 0 : index
    %c0_7 = arith.constant 0 : index
    %10 = vector.load %arg2[%c0_6, %c0_7] : memref<4x64xf32, #tpu.memory_space<vmem>>, vector<4x64xf32>
    %cst_8 = arith.constant dense<0.000000e+00> : vector<4x2xf32>
    %11 = tpu.matmul %10, %9, %cst_8 {dimension_numbers = #tpu.dot_dimension_numbers<[1], [0], [0], [1], [0, 0, 1, 1], [], []>} : vector<4x64xf32>, vector<64x2xf32>, vector<4x2xf32> -> vector<4x2xf32>
    %c0_9 = arith.constant 0 : index
    %c0_10 = arith.constant 0 : index
    %12 = vector.load %arg3[%c0_9, %c0_10] : memref<4x1xf32, #tpu.memory_space<vmem>>, vector<4x1xf32>
    %13 = vector.broadcast %12 : vector<4x1xf32> to vector<4x2xf32>
    %14 = arith.addf %11, %13 : vector<4x2xf32>
    %cst_11 = arith.constant 0.000000e+00 : f32
    %15 = vector.broadcast %cst_11 : f32 to vector<4x2xf32>
    %16 = arith.maximumf %14, %15 : vector<4x2xf32>
    %c0_12 = arith.constant 0 : index
    %c0_13 = arith.constant 0 : index
    %17 = vector.load %arg4[%c0_12, %c0_13] : memref<64x4xf32, #tpu.memory_space<vmem>>, vector<64x4xf32>
    %cst_14 = arith.constant dense<0.000000e+00> : vector<64x2xf32>
    %18 = tpu.matmul %17, %16, %cst_14 {dimension_numbers = #tpu.dot_dimension_numbers<[1], [0], [0], [1], [0, 0, 1, 1], [], []>} : vector<64x4xf32>, vector<4x2xf32>, vector<64x2xf32> -> vector<64x2xf32>
    %c0_15 = arith.constant 0 : index
    %c0_16 = arith.constant 0 : index
    %19 = vector.load %arg5[%c0_15, %c0_16] : memref<64x1xf32, #tpu.memory_space<vmem>>, vector<64x1xf32>
    %20 = vector.broadcast %19 : vector<64x1xf32> to vector<64x2xf32>
    %21 = arith.addf %18, %20 : vector<64x2xf32>
    %22 = vector.extract_strided_slice %21 {offsets = [0, 0], sizes = [64, 1], strides = [1, 1]} : vector<64x2xf32> to vector<64x1xf32>
    %23 = vector.extract_strided_slice %21 {offsets = [0, 1], sizes = [64, 1], strides = [1, 1]} : vector<64x2xf32> to vector<64x1xf32>
    %24 = arith.addf %22, %23 : vector<64x1xf32>
    %25 = arith.negf %24 : vector<64x1xf32>
    %26 = math.exp %25 : vector<64x1xf32>
    %cst_17 = arith.constant 1.000000e+00 : f32
    %27 = vector.broadcast %cst_17 : f32 to vector<64x1xf32>
    %28 = arith.addf %27, %26 : vector<64x1xf32>
    %29 = arith.divf %27, %28 : vector<64x1xf32>
    %30 = vector.shape_cast %29 : vector<64x1xf32> to vector<1x64x1xf32>
    %31 = vector.broadcast %30 : vector<1x64x1xf32> to vector<2x64x256xf32>
    %32 = arith.mulf %0, %31 : vector<2x64x256xf32>
    %c0_18 = arith.constant 0 : index
    %c0_19 = arith.constant 0 : index
    %c0_20 = arith.constant 0 : index
    %33 = vector.load %arg6[%c0_18, %c0_19, %c0_20] : memref<2x64x256xf32, #tpu.memory_space<vmem>>, vector<2x64x256xf32>
    tpu.vector_store %arg6[%c0_18, %c0_19, %c0_20], %32 {strides = array<i32>} : memref<2x64x256xf32, #tpu.memory_space<vmem>>, vector<2x64x256xf32>,
    return
  }
  func.func @transform_0(%arg0: i32) -> (i32, i32, i32) {
    %c0_i32 = arith.constant 0 : i32
    %c0_i32_0 = arith.constant 0 : i32
    %c0_i32_1 = arith.constant 0 : i32
    %c0_i32_2 = arith.constant 0 : i32
    return %c0_i32, %c0_i32_0, %c0_i32_1 : i32, i32, i32
  }
  func.func @transform_1(%arg0: i32) -> (i32, i32) {
    %c0_i32 = arith.constant 0 : i32
    %c0_i32_0 = arith.constant 0 : i32
    %c0_i32_1 = arith.constant 0 : i32
    return %c0_i32, %c0_i32_0 : i32, i32
  }
  func.func @transform_2(%arg0: i32) -> (i32, i32) {
    %c0_i32 = arith.constant 0 : i32
    %c0_i32_0 = arith.constant 0 : i32
    %c0_i32_1 = arith.constant 0 : i32
    return %c0_i32, %c0_i32_0 : i32, i32
  }
  func.func @transform_3(%arg0: i32) -> (i32, i32) {
    %c0_i32 = arith.constant 0 : i32
    %c0_i32_0 = arith.constant 0 : i32
    %c0_i32_1 = arith.constant 0 : i32
    return %c0_i32, %c0_i32_0 : i32, i32
  }
  func.func @transform_4(%arg0: i32) -> (i32, i32) {
    %c0_i32 = arith.constant 0 : i32
    %c0_i32_0 = arith.constant 0 : i32
    %c0_i32_1 = arith.constant 0 : i32
    return %c0_i32, %c0_i32_0 : i32, i32
  }
  func.func @transform_5(%arg0: i32) -> (i32, i32, i32) {
    %c0_i32 = arith.constant 0 : i32
    %c0_i32_0 = arith.constant 0 : i32
    %c0_i32_1 = arith.constant 0 : i32
    %c0_i32_2 = arith.constant 0 : i32
    return %c0_i32, %c0_i32_0, %c0_i32_1 : i32, i32, i32
  }
}

</mosaic_0001>

<llo_original>
// kernel: semantic_attention_module.1
$region0: #{semantic_attention_module.1}
  #allocation0 [shape = 'u32[]', space=smem, size = 0x4, offset = 0x4, fixed_abs, tag = 'smem constant byte address 0x4 - core index']
  #allocation1 [shape = 'u32[144,128]{1,0:T(1,128)}', space=vmem, size = 0x12000, scoped, tag = 'internal scratch']
  %s0 = inlined_call_operand.vmem [shape: f32[2,64,256], index: 0, kind: input, shape index: {}]
  %s1 = inlined_call_operand.vmem [shape: f32[4,64], index: 1, kind: input, shape index: {}]
  %s2 = inlined_call_operand.vmem [shape: f32[4,1], index: 2, kind: input, shape index: {}]
  %s3 = inlined_call_operand.vmem [shape: f32[64,4], index: 3, kind: input, shape index: {}]
  %s4 = inlined_call_operand.vmem [shape: f32[64,1], index: 4, kind: input, shape index: {}]
  %s5 = inlined_call_operand.vmem [shape: f32[2,64,256], index: 5, kind: output, shape index: {}]
  %s6 = sld [smem:[#allocation0]]
  $region30: #{semantic_attention_module.1} parent=0
    _
  %s8 = ssub.s32 1, %s6
  %s9 = scalar_select 0, %s8, %s6
  // Predicated region
  $region2: #{semantic_attention_module.1} parent=0 // pred_check
    _
  $region3: #{semantic_attention_module.1} parent=0 // pred_check_branch
    %11 = sbr.rel (0) target = $region5
  $region4: #{semantic_attention_module.1} parent=0 // pred_region
    _
  $region5: #{semantic_attention_module.1} parent=0 // pred_fallthru
    _
  // Predicated region
  $region6: #{semantic_attention_module.1} parent=0 // pred_check
    _
  $region7: #{semantic_attention_module.1} parent=0 // pred_check_branch
    %13 = sbr.rel (0) target = $region9
  $region8: #{semantic_attention_module.1} parent=0 // pred_region
    _
  $region9: #{semantic_attention_module.1} parent=0 // pred_fallthru
    _
  // Predicated region
  $region10: #{semantic_attention_module.1} parent=0 // pred_check
    _
  $region11: #{semantic_attention_module.1} parent=0 // pred_check_branch
    %15 = sbr.rel (0) target = $region13
  $region12: #{semantic_attention_module.1} parent=0 // pred_region
    _
  $region13: #{semantic_attention_module.1} parent=0 // pred_fallthru
    _
  // Predicated region
  $region14: #{semantic_attention_module.1} parent=0 // pred_check
    _
  $region15: #{semantic_attention_module.1} parent=0 // pred_check_branch
    %17 = sbr.rel (0) target = $region17
  $region16: #{semantic_attention_module.1} parent=0 // pred_region
    _
  $region17: #{semantic_attention_module.1} parent=0 // pred_fallthru
    _
  // Predicated region
  $region18: #{semantic_attention_module.1} parent=0 // pred_check
    _
  $region19: #{semantic_attention_module.1} parent=0 // pred_check_branch
    %19 = sbr.rel (0) target = $region21
  $region20: #{semantic_attention_module.1} parent=0 // pred_region
    _
  $region21: #{semantic_attention_module.1} parent=0 // pred_fallthru
    _
  %v20 = vld [vmem:[%s0] sm:$0xff]
  %v21 = vld [vmem:[%s0 + $0x8] sm:$0xff]
  %v22 = vld [vmem:[%s0 + $0x10] sm:$0xff]
  %v23 = vld [vmem:[%s0 + $0x18] sm:$0xff]
  %v24 = vld [vmem:[%s0 + $0x20] sm:$0xff]
  %v25 = vld [vmem:[%s0 + $0x28] sm:$0xff]
  %v26 = vld [vmem:[%s0 + $0x30] sm:$0xff]
  %v27 = vld [vmem:[%s0 + $0x38] sm:$0xff]
  %v28 = vld [vmem:[%s0 + $0x40] sm:$0xff]
  %v29 = vld [vmem:[%s0 + $0x48] sm:$0xff]
  %v30 = vld [vmem:[%s0 + $0x50] sm:$0xff]
  %v31 = vld [vmem:[%s0 + $0x58] sm:$0xff]
  %v32 = vld [vmem:[%s0 + $0x60] sm:$0xff]
  %v33 = vld [vmem:[%s0 + $0x68] sm:$0xff]
  %v34 = vld [vmem:[%s0 + $0x70] sm:$0xff]
  %v35 = vld [vmem:[%s0 + $0x78] sm:$0xff]
  %v36 = vld [vmem:[%s0 + $0x80] sm:$0xff]
  %v37 = vld [vmem:[%s0 + $0x88] sm:$0xff]
  %v38 = vld [vmem:[%s0 + $0x90] sm:$0xff]
  %v39 = vld [vmem:[%s0 + $0x98] sm:$0xff]
  %v40 = vld [vmem:[%s0 + $0xa0] sm:$0xff]
  %v41 = vld [vmem:[%s0 + $0xa8] sm:$0xff]
  %v42 = vld [vmem:[%s0 + $0xb0] sm:$0xff]
  %v43 = vld [vmem:[%s0 + $0xb8] sm:$0xff]
  %v44 = vld [vmem:[%s0 + $0xc0] sm:$0xff]
  %v45 = vld [vmem:[%s0 + $0xc8] sm:$0xff]
  %v46 = vld [vmem:[%s0 + $0xd0] sm:$0xff]
  %v47 = vld [vmem:[%s0 + $0xd8] sm:$0xff]
  %v48 = vld [vmem:[%s0 + $0xe0] sm:$0xff]
  %v49 = vld [vmem:[%s0 + $0xe8] sm:$0xff]
  %v50 = vld [vmem:[%s0 + $0xf0] sm:$0xff]
  %v51 = vld [vmem:[%s0 + $0xf8] sm:$0xff]
  %v52 = vmax.f32 %v20, %v21
  %53 = vmax.xlane.f32.xlu0 %v52
  %v54 = vpop.xlane.xlu0 %53
  %v55 = vmax.f32 %v22, %v23
  %56 = vmax.xlane.f32.xlu0 %v55
  %v57 = vpop.xlane.xlu0 %56
  %v58 = vmax.f32 %v24, %v25
  %59 = vmax.xlane.f32.xlu0 %v58
  %v60 = vpop.xlane.xlu0 %59
  %v61 = vmax.f32 %v26, %v27
  %62 = vmax.xlane.f32.xlu0 %v61
  %v63 = vpop.xlane.xlu0 %62
  %v64 = vmax.f32 %v28, %v29
  %65 = vmax.xlane.f32.xlu0 %v64
  %v66 = vpop.xlane.xlu0 %65
  %v67 = vmax.f32 %v30, %v31
  %68 = vmax.xlane.f32.xlu0 %v67
  %v69 = vpop.xlane.xlu0 %68
  %v70 = vmax.f32 %v32, %v33
  %71 = vmax.xlane.f32.xlu0 %v70
  %v72 = vpop.xlane.xlu0 %71
  %v73 = vmax.f32 %v34, %v35
  %74 = vmax.xlane.f32.xlu0 %v73
  %v75 = vpop.xlane.xlu0 %74
  %v76 = vmax.f32 %v36, %v37
  %77 = vmax.xlane.f32.xlu0 %v76
  %v78 = vpop.xlane.xlu0 %77
  %v79 = vmax.f32 %v38, %v39
  %80 = vmax.xlane.f32.xlu0 %v79
  %v81 = vpop.xlane.xlu0 %80
  %v82 = vmax.f32 %v40, %v41
  %83 = vmax.xlane.f32.xlu0 %v82
  %v84 = vpop.xlane.xlu0 %83
  %v85 = vmax.f32 %v42, %v43
  %86 = vmax.xlane.f32.xlu0 %v85
  %v87 = vpop.xlane.xlu0 %86
  %v88 = vmax.f32 %v44, %v45
  %89 = vmax.xlane.f32.xlu0 %v88
  %v90 = vpop.xlane.xlu0 %89
  %v91 = vmax.f32 %v46, %v47
  %92 = vmax.xlane.f32.xlu0 %v91
  %v93 = vpop.xlane.xlu0 %92
  %v94 = vmax.f32 %v48, %v49
  %95 = vmax.xlane.f32.xlu0 %v94
  %v96 = vpop.xlane.xlu0 %95
  %v97 = vmax.f32 %v50, %v51
  %98 = vmax.xlane.f32.xlu0 %v97
  %v99 = vpop.xlane.xlu0 %98
  %v100 = vmax.f32 %v54, %v78
  %v101 = vmax.f32 %v57, %v81
  %v102 = vmax.f32 %v60, %v84
  %v103 = vmax.f32 %v63, %v87
  %v104 = vmax.f32 %v66, %v90
  %v105 = vmax.f32 %v69, %v93
  %v106 = vmax.f32 %v72, %v96
  %v107 = vmax.f32 %v75, %v99
  %v108 = vadd.f32 %v20, %v21
  %109 = vadd.xlane.f32.xlu0 %v108
  %v110 = vpop.xlane.xlu0 %109
  %v111 = vadd.f32 %v22, %v23
  %112 = vadd.xlane.f32.xlu0 %v111
  %v113 = vpop.xlane.xlu0 %112
  %v114 = vadd.f32 %v24, %v25
  %115 = vadd.xlane.f32.xlu0 %v114
  %v116 = vpop.xlane.xlu0 %115
  %v117 = vadd.f32 %v26, %v27
  %118 = vadd.xlane.f32.xlu0 %v117
  %v119 = vpop.xlane.xlu0 %118
  %v120 = vadd.f32 %v28, %v29
  %121 = vadd.xlane.f32.xlu0 %v120
  %v122 = vpop.xlane.xlu0 %121
  %v123 = vadd.f32 %v30, %v31
  %124 = vadd.xlane.f32.xlu0 %v123
  %v125 = vpop.xlane.xlu0 %124
  %v126 = vadd.f32 %v32, %v33
  %127 = vadd.xlane.f32.xlu0 %v126
  %v128 = vpop.xlane.xlu0 %127
  %v129 = vadd.f32 %v34, %v35
  %130 = vadd.xlane.f32.xlu0 %v129
  %v131 = vpop.xlane.xlu0 %130
  %v132 = vadd.f32 %v36, %v37
  %133 = vadd.xlane.f32.xlu0 %v132
  %v134 = vpop.xlane.xlu0 %133
  %v135 = vadd.f32 %v38, %v39
  %136 = vadd.xlane.f32.xlu0 %v135
  %v137 = vpop.xlane.xlu0 %136
  %v138 = vadd.f32 %v40, %v41
  %139 = vadd.xlane.f32.xlu0 %v138
  %v140 = vpop.xlane.xlu0 %139
  %v141 = vadd.f32 %v42, %v43
  %142 = vadd.xlane.f32.xlu0 %v141
  %v143 = vpop.xlane.xlu0 %142
  %v144 = vadd.f32 %v44, %v45
  %145 = vadd.xlane.f32.xlu0 %v144
  %v146 = vpop.xlane.xlu0 %145
  %v147 = vadd.f32 %v46, %v47
  %148 = vadd.xlane.f32.xlu0 %v147
  %v149 = vpop.xlane.xlu0 %148
  %v150 = vadd.f32 %v48, %v49
  %151 = vadd.xlane.f32.xlu0 %v150
  %v152 = vpop.xlane.xlu0 %151
  %v153 = vadd.f32 %v50, %v51
  %154 = vadd.xlane.f32.xlu0 %v153
  %v155 = vpop.xlane.xlu0 %154
  %v156 = vadd.f32 %v110, %v134
  %v157 = vadd.f32 %v113, %v137
  %v158 = vadd.f32 %v116, %v140
  %v159 = vadd.f32 %v119, %v143
  %v160 = vadd.f32 %v122, %v146
  %v161 = vadd.f32 %v125, %v149
  %v162 = vadd.f32 %v128, %v152
  %v163 = vadd.f32 %v131, %v155
  %v164 = vmul.f32 %v156, 0.001953125
  %v165 = vmul.f32 %v157, 0.001953125
  %v166 = vmul.f32 %v158, 0.001953125
  %v167 = vmul.f32 %v159, 0.001953125
  %v168 = vmul.f32 %v160, 0.001953125
  %v169 = vmul.f32 %v161, 0.001953125
  %v170 = vmul.f32 %v162, 0.001953125
  %v171 = vmul.f32 %v163, 0.001953125
  %vm172 = vcmask 7168
  %v173 = vsel %vm172, %v100, %v164
  %v174 = vsel %vm172, %v101, %v165
  %v175 = vsel %vm172, %v102, %v166
  %v176 = vsel %vm172, %v103, %v167
  %v177 = vsel %vm172, %v104, %v168
  %v178 = vsel %vm172, %v105, %v169
  %v179 = vsel %vm172, %v106, %v170
  %v180 = vsel %vm172, %v107, %v171
  %v181 = vld [vmem:[%s1] sm:$0xf]
  %v182 = vld [vmem:[%s2] sm:$0xf]
  %184 = vset.pattern.permute.xlu0 0
  %185 = vperm.xlu0 %184, %v182
  %v186 = vpop.permute.xlu0 %185
  %vm188 = vcmask 523264
  %v190 = vsel %vm188, %v181, 0
  %192 = vmatprep.subr.mxu0 0.0
  %193 = vmatpush1.msra.mxu0 %v173
  %194 = vmatprep.subr.mxu0 0.0
  %195 = vmatpush1.msra.mxu0 %v174
  %196 = vmatprep.subr.mxu0 0.0
  %197 = vmatpush1.msra.mxu0 %v175
  %198 = vmatprep.subr.mxu0 0.0
  %199 = vmatpush1.msra.mxu0 %v176
  %200 = vmatprep.subr.mxu0 0.0
  %201 = vmatpush1.msra.mxu0 %v177
  %202 = vmatprep.subr.mxu0 0.0
  %203 = vmatpush1.msra.mxu0 %v178
  %204 = vmatprep.subr.mxu0 0.0
  %205 = vmatpush1.msra.mxu0 %v179
  %206 = vmatprep.subr.mxu0 0.0
  %207 = vmatpush1.msra.mxu0 %v180
  %208 = vmatprep.subr.mxu0 0.0
  %209 = vmatpush1.msra.mxu0 0.0
  %210 = vmatprep.subr.mxu0 0.0
  %211 = vmatpush1.msra.mxu0 0.0
  %212 = vmatprep.subr.mxu0 0.0
  %213 = vmatpush1.msra.mxu0 0.0
  %214 = vmatprep.subr.mxu0 0.0
  %215 = vmatpush1.msra.mxu0 0.0
  %216 = vmatprep.subr.mxu0 0.0
  %217 = vmatpush1.msra.mxu0 0.0
  %218 = vmatprep.subr.mxu0 0.0
  %219 = vmatpush1.msra.mxu0 0.0
  %220 = vmatprep.subr.mxu0 0.0
  %221 = vmatpush1.msra.mxu0 0.0
  %222 = vmatprep.subr.mxu0 0.0
  %223 = vmatpush1.msra.mxu0 0.0
  %224 = vmatprep.subr.mxu0 0.0
  %225 = vmatpush1.msra.mxu0 0.0
  %226 = vmatprep.subr.mxu0 0.0
  %227 = vmatpush1.msra.mxu0 0.0
  %228 = vmatprep.subr.mxu0 0.0
  %229 = vmatpush1.msra.mxu0 0.0
  %230 = vmatprep.subr.mxu0 0.0
  %231 = vmatpush1.msra.mxu0 0.0
  %232 = vmatprep.subr.mxu0 0.0
  %233 = vmatpush1.msra.mxu0 0.0
  %234 = vmatprep.subr.mxu0 0.0
  %235 = vmatpush1.msra.mxu0 0.0
  %236 = vmatprep.subr.mxu0 0.0
  %237 = vmatpush1.msra.mxu0 0.0
  %238 = vmatprep.subr.mxu0 0.0
  %239 = vmatpush1.msra.mxu0 0.0
  %240 = vmatprep.subr.mxu0 0.0
  %241 = vmatpush1.msra.mxu0 0.0
  %242 = vmatprep.subr.mxu0 0.0
  %243 = vmatpush1.msra.mxu0 0.0
  %244 = vmatprep.subr.mxu0 0.0
  %245 = vmatpush1.msra.mxu0 0.0
  %246 = vmatprep.subr.mxu0 0.0
  %247 = vmatpush1.msra.mxu0 0.0
  %248 = vmatprep.subr.mxu0 0.0
  %249 = vmatpush1.msra.mxu0 0.0
  %250 = vmatprep.subr.mxu0 0.0
  %251 = vmatpush1.msra.mxu0 0.0
  %252 = vmatprep.subr.mxu0 0.0
  %253 = vmatpush1.msra.mxu0 0.0
  %254 = vmatprep.subr.mxu0 0.0
  %255 = vmatpush1.msra.mxu0 0.0
  %256 = vmatprep.mubr.f32.mxu0 0.0
  %257 = vmatmul.mubr.f32.gmra.mrb[0].mxu0 %v190
  %v258 = vpop.f32.mrb[0].mxu0
  %v259 = vadd.f32 %v186, %v258
  %v260 = vpop.f32.mrb[0].mxu0
  %261 = vdwg.mxu0
  %v262 = vmax.f32 %v259, 0.0
  %v263 = vld [vmem:[%s3] sm:$0xff]
  %v264 = vld [vmem:[%s3 + $0x8] sm:$0xff]
  %v265 = vld [vmem:[%s3 + $0x10] sm:$0xff]
  %v266 = vld [vmem:[%s3 + $0x18] sm:$0xff]
  %v267 = vld [vmem:[%s3 + $0x20] sm:$0xff]
  %v268 = vld [vmem:[%s3 + $0x28] sm:$0xff]
  %v269 = vld [vmem:[%s3 + $0x30] sm:$0xff]
  %v270 = vld [vmem:[%s3 + $0x38] sm:$0xff]
  %v271 = vld [vmem:[%s4] sm:$0xff]
  %v272 = vld [vmem:[%s4 + $0x8] sm:$0xff]
  %v273 = vld [vmem:[%s4 + $0x10] sm:$0xff]
  %v274 = vld [vmem:[%s4 + $0x18] sm:$0xff]
  %v275 = vld [vmem:[%s4 + $0x20] sm:$0xff]
  %v276 = vld [vmem:[%s4 + $0x28] sm:$0xff]
  %v277 = vld [vmem:[%s4 + $0x30] sm:$0xff]
  %v278 = vld [vmem:[%s4 + $0x38] sm:$0xff]
  %280 = vset.pattern.permute.xlu0 0
  %281 = vperm.xlu0 %280, %v271
  %v282 = vpop.permute.xlu0 %281
  %285 = vset.pattern.permute.xlu0 0
  %286 = vperm.xlu0 %285, %v272
  %v287 = vpop.permute.xlu0 %286
  %290 = vset.pattern.permute.xlu0 0
  %291 = vperm.xlu0 %290, %v273
  %v292 = vpop.permute.xlu0 %291
  %295 = vset.pattern.permute.xlu0 0
  %296 = vperm.xlu0 %295, %v274
  %v297 = vpop.permute.xlu0 %296
  %300 = vset.pattern.permute.xlu0 0
  %301 = vperm.xlu0 %300, %v275
  %v302 = vpop.permute.xlu0 %301
  %305 = vset.pattern.permute.xlu0 0
  %306 = vperm.xlu0 %305, %v276
  %v307 = vpop.permute.xlu0 %306
  %310 = vset.pattern.permute.xlu0 0
  %311 = vperm.xlu0 %310, %v277
  %v312 = vpop.permute.xlu0 %311
  %315 = vset.pattern.permute.xlu0 0
  %316 = vperm.xlu0 %315, %v278
  %v317 = vpop.permute.xlu0 %316
  %vm319 = vcmask 31744
  %v321 = vsel %vm319, %v263, 0
  %v324 = vsel %vm319, %v264, 0
  %v327 = vsel %vm319, %v265, 0
  %v330 = vsel %vm319, %v266, 0
  %v333 = vsel %vm319, %v267, 0
  %v336 = vsel %vm319, %v268, 0
  %v339 = vsel %vm319, %v269, 0
  %v342 = vsel %vm319, %v270, 0
  %vm344 = vcmask 1043456
  %v346 = vsel %vm344, %v262, 0
  %348 = vmatprep.subr.mxu0 0.0
  %349 = vmatpush1.msra.mxu0 %v346
  %350 = vmatprep.subr.mxu0 0.0
  %351 = vmatpush1.msra.mxu0 0.0
  %352 = vmatprep.subr.mxu0 0.0
  %353 = vmatpush1.msra.mxu0 0.0
  %354 = vmatprep.subr.mxu0 0.0
  %355 = vmatpush1.msra.mxu0 0.0
  %356 = vmatprep.subr.mxu0 0.0
  %357 = vmatpush1.msra.mxu0 0.0
  %358 = vmatprep.subr.mxu0 0.0
  %359 = vmatpush1.msra.mxu0 0.0
  %360 = vmatprep.subr.mxu0 0.0
  %361 = vmatpush1.msra.mxu0 0.0
  %362 = vmatprep.subr.mxu0 0.0
  %363 = vmatpush1.msra.mxu0 0.0
  %364 = vmatprep.subr.mxu0 0.0
  %365 = vmatpush1.msra.mxu0 0.0
  %366 = vmatprep.subr.mxu0 0.0
  %367 = vmatpush1.msra.mxu0 0.0
  %368 = vmatprep.subr.mxu0 0.0
  %369 = vmatpush1.msra.mxu0 0.0
  %370 = vmatprep.subr.mxu0 0.0
  %371 = vmatpush1.msra.mxu0 0.0
  %372 = vmatprep.subr.mxu0 0.0
  %373 = vmatpush1.msra.mxu0 0.0
  %374 = vmatprep.subr.mxu0 0.0
  %375 = vmatpush1.msra.mxu0 0.0
  %376 = vmatprep.subr.mxu0 0.0
  %377 = vmatpush1.msra.mxu0 0.0
  %378 = vmatprep.subr.mxu0 0.0
  %379 = vmatpush1.msra.mxu0 0.0
  %380 = vmatprep.subr.mxu0 0.0
  %381 = vmatpush1.msra.mxu0 0.0
  %382 = vmatprep.subr.mxu0 0.0
  %383 = vmatpush1.msra.mxu0 0.0
  %384 = vmatprep.subr.mxu0 0.0
  %385 = vmatpush1.msra.mxu0 0.0
  %386 = vmatprep.subr.mxu0 0.0
  %387 = vmatpush1.msra.mxu0 0.0
  %388 = vmatprep.subr.mxu0 0.0
  %389 = vmatpush1.msra.mxu0 0.0
  %390 = vmatprep.subr.mxu0 0.0
  %391 = vmatpush1.msra.mxu0 0.0
  %392 = vmatprep.subr.mxu0 0.0
  %393 = vmatpush1.msra.mxu0 0.0
  %394 = vmatprep.subr.mxu0 0.0
  %395 = vmatpush1.msra.mxu0 0.0
  %396 = vmatprep.subr.mxu0 0.0
  %397 = vmatpush1.msra.mxu0 0.0
  %398 = vmatprep.subr.mxu0 0.0
  %399 = vmatpush1.msra.mxu0 0.0
  %400 = vmatprep.subr.mxu0 0.0
  %401 = vmatpush1.msra.mxu0 0.0
  %402 = vmatprep.subr.mxu0 0.0
  %403 = vmatpush1.msra.mxu0 0.0
  %404 = vmatprep.subr.mxu0 0.0
  %405 = vmatpush1.msra.mxu0 0.0
  %406 = vmatprep.subr.mxu0 0.0
  %407 = vmatpush1.msra.mxu0 0.0
  %408 = vmatprep.subr.mxu0 0.0
  %409 = vmatpush1.msra.mxu0 0.0
  %410 = vmatprep.subr.mxu0 0.0
  %411 = vmatpush1.msra.mxu0 0.0
  %412 = vmatprep.mubr.f32.mxu0 0.0
  %413 = vmatmul.mubr.f32.gmra.mrb[0].mxu0 %v321
  %v414 = vpop.f32.mrb[0].mxu0
  %v415 = vadd.f32 %v282, %v414
  %v416 = vpop.f32.mrb[0].mxu0
  %417 = vmatprep.mubr.f32.mxu0 0.0
  %418 = vmatmul.mubr.f32.gmra.mrb[0].mxu0 %v324
  %v419 = vpop.f32.mrb[0].mxu0
  %v420 = vadd.f32 %v287, %v419
  %v421 = vpop.f32.mrb[0].mxu0
  %422 = vmatprep.mubr.f32.mxu0 0.0
  %423 = vmatmul.mubr.f32.gmra.mrb[0].mxu0 %v327
  %v424 = vpop.f32.mrb[0].mxu0
  %v425 = vadd.f32 %v292, %v424
  %v426 = vpop.f32.mrb[0].mxu0
  %427 = vmatprep.mubr.f32.mxu0 0.0
  %428 = vmatmul.mubr.f32.gmra.mrb[0].mxu0 %v330
  %v429 = vpop.f32.mrb[0].mxu0
  %v430 = vadd.f32 %v297, %v429
  %v431 = vpop.f32.mrb[0].mxu0
  %432 = vmatprep.mubr.f32.mxu0 0.0
  %433 = vmatmul.mubr.f32.gmra.mrb[0].mxu0 %v333
  %v434 = vpop.f32.mrb[0].mxu0
  %v435 = vadd.f32 %v302, %v434
  %v436 = vpop.f32.mrb[0].mxu0
  %437 = vmatprep.mubr.f32.mxu0 0.0
  %438 = vmatmul.mubr.f32.gmra.mrb[0].mxu0 %v336
  %v439 = vpop.f32.mrb[0].mxu0
  %v440 = vadd.f32 %v307, %v439
  %v441 = vpop.f32.mrb[0].mxu0
  %442 = vmatprep.mubr.f32.mxu0 0.0
  %443 = vmatmul.mubr.f32.gmra.mrb[0].mxu0 %v339
  %v444 = vpop.f32.mrb[0].mxu0
  %v445 = vadd.f32 %v312, %v444
  %v446 = vpop.f32.mrb[0].mxu0
  %447 = vmatprep.mubr.f32.mxu0 0.0
  %448 = vmatmul.mubr.f32.gmra.mrb[0].mxu0 %v342
  %v449 = vpop.f32.mrb[0].mxu0
  %v450 = vadd.f32 %v317, %v449
  %v451 = vpop.f32.mrb[0].mxu0
  %452 = vdwg.mxu0
  %461 = vrot.lane.b32.xlu0 %v415, 127
  %v462 = vpop.permute.xlu0 %461
  %463 = vrot.lane.b32.xlu0 %v420, 127
  %v464 = vpop.permute.xlu0 %463
  %465 = vrot.lane.b32.xlu0 %v425, 127
  %v466 = vpop.permute.xlu0 %465
  %467 = vrot.lane.b32.xlu0 %v430, 127
  %v468 = vpop.permute.xlu0 %467
  %469 = vrot.lane.b32.xlu0 %v435, 127
  %v470 = vpop.permute.xlu0 %469
  %471 = vrot.lane.b32.xlu0 %v440, 127
  %v472 = vpop.permute.xlu0 %471
  %473 = vrot.lane.b32.xlu0 %v445, 127
  %v474 = vpop.permute.xlu0 %473
  %475 = vrot.lane.b32.xlu0 %v450, 127
  %v476 = vpop.permute.xlu0 %475
  %v485 = vadd.f32 %v415, %v462
  %v486 = vadd.f32 %v420, %v464
  %v487 = vadd.f32 %v425, %v466
  %v488 = vadd.f32 %v430, %v468
  %v489 = vadd.f32 %v435, %v470
  %v490 = vadd.f32 %v440, %v472
  %v491 = vadd.f32 %v445, %v474
  %v492 = vadd.f32 %v450, %v476
  %v493 = vxor.u32 %v485, 2147483648
  %v494 = vxor.u32 %v486, 2147483648
  %v495 = vxor.u32 %v487, 2147483648
  %v496 = vxor.u32 %v488, 2147483648
  %v497 = vxor.u32 %v489, 2147483648
  %v498 = vxor.u32 %v490, 2147483648
  %v499 = vxor.u32 %v491, 2147483648
  %v500 = vxor.u32 %v492, 2147483648
  %v501 = vmul.f32 %v493, 1.442695
  %v502 = vpow.pop %v501
  %v503 = vmul.f32 %v494, 1.442695
  %v504 = vpow.pop %v503
  %v505 = vmul.f32 %v495, 1.442695
  %v506 = vpow.pop %v505
  %v507 = vmul.f32 %v496, 1.442695
  %v508 = vpow.pop %v507
  %v509 = vmul.f32 %v497, 1.442695
  %v510 = vpow.pop %v509
  %v511 = vmul.f32 %v498, 1.442695
  %v512 = vpow.pop %v511
  %v513 = vmul.f32 %v499, 1.442695
  %v514 = vpow.pop %v513
  %v515 = vmul.f32 %v500, 1.442695
  %v516 = vpow.pop %v515
  %v517 = vadd.f32 %v502, 1.0
  %v518 = vadd.f32 %v504, 1.0
  %v519 = vadd.f32 %v506, 1.0
  %v520 = vadd.f32 %v508, 1.0
  %v521 = vadd.f32 %v510, 1.0
  %v522 = vadd.f32 %v512, 1.0
  %v523 = vadd.f32 %v514, 1.0
  %v524 = vadd.f32 %v516, 1.0
  %v525 = vrcp.pop %v517
  %v526 = vmul.f32 1.0, %v525
  %v527 = vrcp.pop %v518
  %v528 = vmul.f32 1.0, %v527
  %v529 = vrcp.pop %v519
  %v530 = vmul.f32 1.0, %v529
  %v531 = vrcp.pop %v520
  %v532 = vmul.f32 1.0, %v531
  %v533 = vrcp.pop %v521
  %v534 = vmul.f32 1.0, %v533
  %v535 = vrcp.pop %v522
  %v536 = vmul.f32 1.0, %v535
  %v537 = vrcp.pop %v523
  %v538 = vmul.f32 1.0, %v537
  %v539 = vrcp.pop %v524
  %v540 = vmul.f32 1.0, %v539
  %542 = vset.pattern.permute.xlu0 0
  %543 = vperm.xlu0 %542, %v526
  %v544 = vpop.permute.xlu0 %543
  %547 = vset.pattern.permute.xlu0 0
  %548 = vperm.xlu0 %547, %v528
  %v549 = vpop.permute.xlu0 %548
  %552 = vset.pattern.permute.xlu0 0
  %553 = vperm.xlu0 %552, %v530
  %v554 = vpop.permute.xlu0 %553
  %557 = vset.pattern.permute.xlu0 0
  %558 = vperm.xlu0 %557, %v532
  %v559 = vpop.permute.xlu0 %558
  %562 = vset.pattern.permute.xlu0 0
  %563 = vperm.xlu0 %562, %v534
  %v564 = vpop.permute.xlu0 %563
  %567 = vset.pattern.permute.xlu0 0
  %568 = vperm.xlu0 %567, %v536
  %v569 = vpop.permute.xlu0 %568
  %572 = vset.pattern.permute.xlu0 0
  %573 = vperm.xlu0 %572, %v538
  %v574 = vpop.permute.xlu0 %573
  %577 = vset.pattern.permute.xlu0 0
  %578 = vperm.xlu0 %577, %v540
  %v579 = vpop.permute.xlu0 %578
  %v581 = vmul.f32 %v20, %v544
  %v582 = vmul.f32 %v21, %v544
  %v583 = vmul.f32 %v22, %v549
  %v584 = vmul.f32 %v23, %v549
  %v585 = vmul.f32 %v24, %v554
  %v586 = vmul.f32 %v25, %v554
  %v587 = vmul.f32 %v26, %v559
  %v588 = vmul.f32 %v27, %v559
  %v589 = vmul.f32 %v28, %v564
  %v590 = vmul.f32 %v29, %v564
  %v591 = vmul.f32 %v30, %v569
  %v592 = vmul.f32 %v31, %v569
  %v593 = vmul.f32 %v32, %v574
  %v594 = vmul.f32 %v33, %v574
  %v595 = vmul.f32 %v34, %v579
  %v596 = vmul.f32 %v35, %v579
  %v597 = vmul.f32 %v36, %v544
  %v598 = vmul.f32 %v37, %v544
  %v599 = vmul.f32 %v38, %v549
  %v600 = vmul.f32 %v39, %v549
  %v601 = vmul.f32 %v40, %v554
  %v602 = vmul.f32 %v41, %v554
  %v603 = vmul.f32 %v42, %v559
  %v604 = vmul.f32 %v43, %v559
  %v605 = vmul.f32 %v44, %v564
  %v606 = vmul.f32 %v45, %v564
  %v607 = vmul.f32 %v46, %v569
  %v608 = vmul.f32 %v47, %v569
  %v609 = vmul.f32 %v48, %v574
  %v610 = vmul.f32 %v49, %v574
  %v611 = vmul.f32 %v50, %v579
  %v612 = vmul.f32 %v51, %v579
  %613 = vst [vmem:[%s5] sm:$0xff] %v581
  %614 = vst [vmem:[%s5 + $0x8] sm:$0xff] %v582
  %615 = vst [vmem:[%s5 + $0x10] sm:$0xff] %v583
  %616 = vst [vmem:[%s5 + $0x18] sm:$0xff] %v584
  %617 = vst [vmem:[%s5 + $0x20] sm:$0xff] %v585
  %618 = vst [vmem:[%s5 + $0x28] sm:$0xff] %v586
  %619 = vst [vmem:[%s5 + $0x30] sm:$0xff] %v587
  %620 = vst [vmem:[%s5 + $0x38] sm:$0xff] %v588
  %621 = vst [vmem:[%s5 + $0x40] sm:$0xff] %v589
  %622 = vst [vmem:[%s5 + $0x48] sm:$0xff] %v590
  %623 = vst [vmem:[%s5 + $0x50] sm:$0xff] %v591
  %624 = vst [vmem:[%s5 + $0x58] sm:$0xff] %v592
  %625 = vst [vmem:[%s5 + $0x60] sm:$0xff] %v593
  %626 = vst [vmem:[%s5 + $0x68] sm:$0xff] %v594
  %627 = vst [vmem:[%s5 + $0x70] sm:$0xff] %v595
  %628 = vst [vmem:[%s5 + $0x78] sm:$0xff] %v596
  %629 = vst [vmem:[%s5 + $0x80] sm:$0xff] %v597
  %630 = vst [vmem:[%s5 + $0x88] sm:$0xff] %v598
  %631 = vst [vmem:[%s5 + $0x90] sm:$0xff] %v599
  %632 = vst [vmem:[%s5 + $0x98] sm:$0xff] %v600
  %633 = vst [vmem:[%s5 + $0xa0] sm:$0xff] %v601
  %634 = vst [vmem:[%s5 + $0xa8] sm:$0xff] %v602
  %635 = vst [vmem:[%s5 + $0xb0] sm:$0xff] %v603
  %636 = vst [vmem:[%s5 + $0xb8] sm:$0xff] %v604
  %637 = vst [vmem:[%s5 + $0xc0] sm:$0xff] %v605
  %638 = vst [vmem:[%s5 + $0xc8] sm:$0xff] %v606
  %639 = vst [vmem:[%s5 + $0xd0] sm:$0xff] %v607
  %640 = vst [vmem:[%s5 + $0xd8] sm:$0xff] %v608
  %641 = vst [vmem:[%s5 + $0xe0] sm:$0xff] %v609
  %642 = vst [vmem:[%s5 + $0xe8] sm:$0xff] %v610
  %643 = vst [vmem:[%s5 + $0xf0] sm:$0xff] %v611
  %644 = vst [vmem:[%s5 + $0xf8] sm:$0xff] %v612
  // Predicated region
  $region22: #{semantic_attention_module.1} parent=0 // pred_check
    _
  $region23: #{semantic_attention_module.1} parent=0 // pred_check_branch
    %646 = sbr.rel (0) target = $region25
  $region24: #{semantic_attention_module.1} parent=0 // pred_region
    _
  $region25: #{semantic_attention_module.1} parent=0 // pred_fallthru
    _
  // Predicated region
  $region26: #{semantic_attention_module.1} parent=0 // pred_check
    _
  $region27: #{semantic_attention_module.1} parent=0 // pred_check_branch
    %648 = sbr.rel (0) target = $region29
  $region28: #{semantic_attention_module.1} parent=0 // pred_region
    _
  $region29: #{semantic_attention_module.1} parent=0 // pred_fallthru
    _

</llo_original>
